<compile_context>
chip_gen: v6e
topology: v6e:2x2x1
jax: 0.10.0
libtpu: 0.0.40
codegen_flags: <defaults>
</compile_context>

<pallas_src>
import functools

import jax
import jax.numpy as jnp
from jax.experimental import pallas as pl
from jax.experimental.pallas import tpu as pltpu


def _round_up(x, m):
    return ((x + m - 1) // m) * m


# ---------------------------------------------------------------------------
# Pallas kernel: full actor + critic MLP stacks (the matmul hot path).
# ---------------------------------------------------------------------------
def _pnet_kernel(h, n_action,
                 x_ref, w05_ref, w1_ref, w2_ref, w3_ref, w4_ref,
                 w6_ref, w7_ref, w8_ref, bias_ref, out_ref):
    f32 = jnp.float32
    bf16 = jnp.bfloat16
    x = x_ref[...]                                    # (TILE_N, 180) bf16

    # --- unpack the packed bias slab with static offsets --------------------
    o = 0

    def take(width):
        nonlocal o
        b = bias_ref[:, o:o + width]
        o += width
        return b

    b05 = take(h + 64)        # [b0 | b5]
    b1 = take(h)
    b2 = take(h)
    b3 = take(h // 4)
    b4 = take(n_action)
    b6 = take(15)
    b7 = take(16)
    b8 = take(1)

    # --- fused first layer: actor AT_obs_encoder + critic CT_encode[0] ------
    hc = jnp.dot(x, w05_ref[...], preferred_element_type=f32) + b05
    a = jnp.maximum(hc[:, :h], 0.0)                   # actor encoding (ReLU)
    c = jnp.maximum(hc[:, h:h + 64], 0.0)             # critic encoding (ReLU)

    # --- actor: EXTRACT (Linear+ReLU, Linear) -> AT_get_logit ---------------
    a = jnp.maximum(
        jnp.dot(a.astype(bf16), w1_ref[...], preferred_element_type=f32) + b1, 0.0)
    a = jnp.dot(a.astype(bf16), w2_ref[...], preferred_element_type=f32) + b2
    g = jnp.maximum(
        jnp.dot(a.astype(bf16), w3_ref[...], preferred_element_type=f32) + b3, 0.0)
    logits = jnp.dot(g.astype(bf16), w4_ref[...], preferred_element_type=f32) + b4

    # --- critic: CT_encode[2] -> CT_getvalue ---------------------------------
    c = jnp.dot(c.astype(bf16), w6_ref[...], preferred_element_type=f32) + b6
    v = jnp.maximum(
        jnp.dot(c.astype(bf16), w7_ref[...], preferred_element_type=f32) + b7, 0.0)
    value = jnp.dot(v.astype(bf16), w8_ref[...], preferred_element_type=f32) + b8

    # single lane-contiguous output slab: [logits | value]
    out_ref[...] = jnp.concatenate([logits, value], axis=-1)


def _pnet_feature(kparams, x, *, max_tile_n=1024):
    """x: (N, obs_feat) f32 -> (logits (N, n_action), value (N, 1))."""
    N, F = x.shape
    h = kparams["h"]
    n_action = kparams["n_action"]
    out_w = n_action + 1

    # Row tile: multiple of 8, capped so double-buffered tiles fit VMEM on v5e/v7x.
    tile_n = min(max_tile_n, _round_up(max(N, 1), 8))
    n_pad = _round_up(N, tile_n)
    if n_pad != N:
        x = jnp.pad(x, ((0, n_pad - N), (0, 0)))
    x = x.astype(jnp.bfloat16)

    weights = [kparams[k] for k in
               ("w05", "w1", "w2", "w3", "w4", "w6", "w7", "w8")]
    bias = kparams["bias"]

    # Weights / packed bias resident in VMEM across steps (constant index maps).
    w_specs = [pl.BlockSpec(w.shape, lambda i: (0, 0)) for w in weights]
    b_spec = pl.BlockSpec(bias.shape, lambda i: (0, 0))

    flops_per_row = 2 * (F * (h + 64) + 2 * h * h + h * (h // 4)
                         + (h // 4) * n_action + 64 * 15 + 15 * 16 + 16 * 1)
    bytes_w = sum(int(w.size) * w.dtype.itemsize for w in weights) + int(bias.size) * 4
    cost = pl.CostEstimate(
        flops=flops_per_row * n_pad,
        transcendentals=0,
        bytes_accessed=n_pad * (F * 2 + out_w * 4) + bytes_w,
    )

    out = pl.pallas_call(
        functools.partial(_pnet_kernel, h, n_action),
        out_shape=jax.ShapeDtypeStruct((n_pad, out_w), jnp.float32),
        grid=(n_pad // tile_n,),
        in_specs=[pl.BlockSpec((tile_n, F), lambda i: (i, 0))] + w_specs + [b_spec],
        out_specs=pl.BlockSpec((tile_n, out_w), lambda i: (i, 0)),
        compiler_params=pltpu.CompilerParams(
            dimension_semantics=("parallel",)),
        cost_estimate=cost,
    )(x, *weights, bias)

    logits = out[:N, :n_action]
    value = out[:N, n_action:out_w]
    return logits, value


# ---------------------------------------------------------------------------
# Parameter init (PyTorch nn.Linear default init) + packing for the kernel.
# ---------------------------------------------------------------------------
def _linear_params(key, in_dim, out_dim):
    """PyTorch nn.Linear default init: U(-1/sqrt(fan_in), 1/sqrt(fan_in))."""
    kw, kb = jax.random.split(key)
    bound = 1.0 / float(in_dim) ** 0.5
    w = jax.random.uniform(kw, (in_dim, out_dim), jnp.float32, -bound, bound)
    b = jax.random.uniform(kb, (1, out_dim), jnp.float32, -bound, bound)
    return w, b


def init_pnet_params(key, obs_dim, n_action, hidden_dim):
    obs_feat = obs_dim * 12
    # Pnet.CT_encode hard-codes in_dim = 15*12; the fused first layer assumes the
    # critic consumes the same obs feature width as the actor.
    assert obs_feat == 15 * 12, "Pnet requires obs_dim == 15 (CT_encode in_dim is 15*12)"
    h = hidden_dim
    dims = [
        ("w0", "b0", obs_feat, h),       # AT_obs_encoder
        ("w1", "b1", h, h),              # AT_extract_mod[0]
        ("w2", "b2", h, h),              # AT_extract_mod[1]
        ("w3", "b3", h, h // 4),         # AT_get_logit[0]
        ("w4", "b4", h // 4, n_action),  # AT_get_logit LinearFinal
        ("w5", "b5", 15 * 12, 64),       # CT_encode[0]
        ("w6", "b6", 64, 15),            # CT_encode[2]
        ("w7", "b7", 15, 16),            # CT_getvalue[0]
        ("w8", "b8", 16, 1),             # CT_getvalue[2]
    ]
    raw = {}
    keys = jax.random.split(key, len(dims))
    for k, (wn, bn, di, do) in zip(keys, dims):
        raw[wn], raw[bn] = _linear_params(k, di, do)
    return raw


def pack_pnet_params(raw, hidden_dim, n_action):
    """Fuse w0|w5, pack all biases into one f32 slab, cast weights to bf16."""
    bf16 = jnp.bfloat16
    w05 = jnp.concatenate([raw["w0"], raw["w5"]], axis=1)
    bias = jnp.concatenate(
        [raw["b0"], raw["b5"], raw["b1"], raw["b2"], raw["b3"], raw["b4"],
         raw["b6"], raw["b7"], raw["b8"]], axis=1).astype(jnp.float32)
    return {
        "h": hidden_dim,
        "n_action": n_action,
        "w05": w05.astype(bf16),
        "w1": raw["w1"].astype(bf16),
        "w2": raw["w2"].astype(bf16),
        "w3": raw["w3"].astype(bf16),
        "w4": raw["w4"].astype(bf16),
        "w6": raw["w6"].astype(bf16),
        "w7": raw["w7"].astype(bf16),
        "w8": raw["w8"].astype(bf16),
        "bias": bias,
    }


# ---------------------------------------------------------------------------
# Glue: forward = feature kernel + logit2act (argmax / sample, log-probs).
# ---------------------------------------------------------------------------
def pnet_forward(kparams, obs, eval_mode=False, test_mode=True,
                 eval_act=None, sample_key=None):
    """Mirrors Pnet.forward(obs, eval_mode, test_mode, eval_act)."""
    B, A, F = obs.shape
    x = obs.reshape(B * A, F).astype(jnp.float32)

    logits, value = _pnet_feature(kparams, x)            # hot path in Pallas
    logits = logits.reshape(B, A, -1)
    value = value.reshape(B, A, 1)

    log_probs = jax.nn.log_softmax(logits, axis=-1)
    probs = jnp.exp(log_probs)

    if test_mode:
        act = jnp.argmax(probs, axis=2)                  # (B, A), int
    elif eval_mode:
        act = eval_act
    else:
        # TODO(synk): torch Categorical.sample() RNG stream cannot be reproduced bit-exact.
        act = jax.random.categorical(sample_key, logits, axis=-1)

    # _get_act_log_probs: log_prob(act.squeeze(-1)).unsqueeze(-1) -> (B, A, 1)
    act_log_probs = jnp.take_along_axis(log_probs, act[..., None].astype(jnp.int32),
                                        axis=-1)

    if not eval_mode:
        return act, value, act_log_probs
    dist_entropy = (-jnp.sum(probs * log_probs, axis=-1)).mean(-1)
    others = {"ae_io": {"obs": obs, "obs_hat": obs}}
    return value, act_log_probs, dist_entropy, probs, others


# ---------------------------------------------------------------------------
if __name__ == "__main__":
    # Small shapes consistent with the module: CT_encode forces obs feature dim = 15*12.
    batch, n_agents = 2, 4
    obs_dim = 15                 # -> obs feature dim = obs_dim * 12 = 180
    n_action = 5
    hidden_dim = 32

    root = jax.random.PRNGKey(0)
    k_param, k_obs = jax.random.split(root)

    raw_params = init_pnet_params(k_param, obs_dim, n_action, hidden_dim)
    kparams = pack_pnet_params(raw_params, hidden_dim, n_action)
    obs = jax.random.normal(k_obs, (batch, n_agents, obs_dim * 12), dtype=jnp.float32)

    # forward(obs, eval_mode=False, test_mode=True, eval_act=None)
    act, value, act_log_probs = pnet_forward(kparams, obs,
                                             eval_mode=False, test_mode=True)
    jax.block_until_ready((act, value, act_log_probs))

    assert act.shape == (batch, n_agents)
    assert value.shape == (batch, n_agents, 1)
    assert act_log_probs.shape == (batch, n_agents, 1)
    print("KERNEL_OK")
</pallas_src>

<mosaic_0001>
module attributes {stable_mosaic.version = 11 : i64} {
  func.func @_pnet_kernel(%arg0: i32, %arg1: memref<8x180xbf16, #tpu.memory_space<vmem>>, %arg2: memref<180x96xbf16, #tpu.memory_space<vmem>>, %arg3: memref<32x32xbf16, #tpu.memory_space<vmem>>, %arg4: memref<32x32xbf16, #tpu.memory_space<vmem>>, %arg5: memref<32x8xbf16, #tpu.memory_space<vmem>>, %arg6: memref<8x5xbf16, #tpu.memory_space<vmem>>, %arg7: memref<64x15xbf16, #tpu.memory_space<vmem>>, %arg8: memref<15x16xbf16, #tpu.memory_space<vmem>>, %arg9: memref<16x1xbf16, #tpu.memory_space<vmem>>, %arg10: memref<1x205xf32, #tpu.memory_space<vmem>>, %arg11: memref<8x6xf32, #tpu.memory_space<vmem>>) attributes {dimension_semantics = [#tpu.dimension_semantics<parallel>], iteration_bounds = array<i64: 1>, scalar_prefetch = 0 : i64, scratch_operands = 0 : i64, tpu.core_type = #tpu.core_type<tc>, window_params = [{transform_indices = @transform_0, window_bounds = array<i64: 8, 180>}, {pipeline_mode = #tpu.pipeline_mode<synchronous>, transform_indices = @transform_1, window_bounds = array<i64: 180, 96>}, {pipeline_mode = #tpu.pipeline_mode<synchronous>, transform_indices = @transform_2, window_bounds = array<i64: 32, 32>}, {pipeline_mode = #tpu.pipeline_mode<synchronous>, transform_indices = @transform_3, window_bounds = array<i64: 32, 32>}, {pipeline_mode = #tpu.pipeline_mode<synchronous>, transform_indices = @transform_4, window_bounds = array<i64: 32, 8>}, {pipeline_mode = #tpu.pipeline_mode<synchronous>, transform_indices = @transform_5, window_bounds = array<i64: 8, 5>}, {pipeline_mode = #tpu.pipeline_mode<synchronous>, transform_indices = @transform_6, window_bounds = array<i64: 64, 15>}, {pipeline_mode = #tpu.pipeline_mode<synchronous>, transform_indices = @transform_7, window_bounds = array<i64: 15, 16>}, {pipeline_mode = #tpu.pipeline_mode<synchronous>, transform_indices = @transform_8, window_bounds = array<i64: 16, 1>}, {pipeline_mode = #tpu.pipeline_mode<synchronous>, transform_indices = @transform_9, window_bounds = array<i64: 1, 205>}, {transform_indices = @transform_10, window_bounds = array<i64: 8, 6>}]} {
    %c0 = arith.constant 0 : index
    %c0_0 = arith.constant 0 : index
    %0 = vector.load %arg1[%c0, %c0_0] : memref<8x180xbf16, #tpu.memory_space<vmem>>, vector<8x180xbf16>
    %c0_1 = arith.constant 0 : index
    %c0_2 = arith.constant 0 : index
    %1 = vector.load %arg10[%c0_1, %c0_2] : memref<1x205xf32, #tpu.memory_space<vmem>>, vector<1x96xf32>
    %c0_3 = arith.constant 0 : index
    %c96 = arith.constant 96 : index
    %2 = vector.load %arg10[%c0_3, %c96] : memref<1x205xf32, #tpu.memory_space<vmem>>, vector<1x32xf32>
    %c0_4 = arith.constant 0 : index
    %c128 = arith.constant 128 : index
    %3 = vector.load %arg10[%c0_4, %c128] : memref<1x205xf32, #tpu.memory_space<vmem>>, vector<1x32xf32>
    %c0_5 = arith.constant 0 : index
    %c160 = arith.constant 160 : index
    %4 = vector.load %arg10[%c0_5, %c160] : memref<1x205xf32, #tpu.memory_space<vmem>>, vector<1x8xf32>
    %c0_6 = arith.constant 0 : index
    %c168 = arith.constant 168 : index
    %5 = vector.load %arg10[%c0_6, %c168] : memref<1x205xf32, #tpu.memory_space<vmem>>, vector<1x5xf32>
    %c0_7 = arith.constant 0 : index
    %c173 = arith.constant 173 : index
    %6 = vector.load %arg10[%c0_7, %c173] : memref<1x205xf32, #tpu.memory_space<vmem>>, vector<1x15xf32>
    %c0_8 = arith.constant 0 : index
    %c188 = arith.constant 188 : index
    %7 = vector.load %arg10[%c0_8, %c188] : memref<1x205xf32, #tpu.memory_space<vmem>>, vector<1x16xf32>
    %c0_9 = arith.constant 0 : index
    %c204 = arith.constant 204 : index
    %8 = vector.load %arg10[%c0_9, %c204] : memref<1x205xf32, #tpu.memory_space<vmem>>, vector<1x1xf32>
    %c0_10 = arith.constant 0 : index
    %c0_11 = arith.constant 0 : index
    %9 = vector.load %arg2[%c0_10, %c0_11] : memref<180x96xbf16, #tpu.memory_space<vmem>>, vector<180x96xbf16>
    %cst = arith.constant dense<0.000000e+00> : vector<8x96xf32>
    %10 = tpu.matmul %0, %9, %cst {dimension_numbers = #tpu.dot_dimension_numbers<[1], [0], [0], [1], [0, 0, 1, 1], [], []>} : vector<8x180xbf16>, vector<180x96xbf16>, vector<8x96xf32> -> vector<8x96xf32>
    %11 = vector.broadcast %1 : vector<1x96xf32> to vector<8x96xf32>
    %12 = arith.addf %10, %11 : vector<8x96xf32>
    %13 = vector.extract_strided_slice %12 {offsets = [0, 0], sizes = [8, 32], strides = [1, 1]} : vector<8x96xf32> to vector<8x32xf32>
    %cst_12 = arith.constant 0.000000e+00 : f32
    %14 = vector.broadcast %cst_12 : f32 to vector<8x32xf32>
    %15 = arith.maximumf %13, %14 : vector<8x32xf32>
    %16 = vector.extract_strided_slice %12 {offsets = [0, 32], sizes = [8, 64], strides = [1, 1]} : vector<8x96xf32> to vector<8x64xf32>
    %cst_13 = arith.constant 0.000000e+00 : f32
    %17 = vector.broadcast %cst_13 : f32 to vector<8x64xf32>
    %18 = arith.maximumf %16, %17 : vector<8x64xf32>
    %19 = arith.truncf %15 : vector<8x32xf32> to vector<8x32xbf16>
    %c0_14 = arith.constant 0 : index
    %c0_15 = arith.constant 0 : index
    %20 = vector.load %arg3[%c0_14, %c0_15] : memref<32x32xbf16, #tpu.memory_space<vmem>>, vector<32x32xbf16>
    %cst_16 = arith.constant dense<0.000000e+00> : vector<8x32xf32>
    %21 = tpu.matmul %19, %20, %cst_16 {dimension_numbers = #tpu.dot_dimension_numbers<[1], [0], [0], [1], [0, 0, 1, 1], [], []>} : vector<8x32xbf16>, vector<32x32xbf16>, vector<8x32xf32> -> vector<8x32xf32>
    %22 = vector.broadcast %2 : vector<1x32xf32> to vector<8x32xf32>
    %23 = arith.addf %21, %22 : vector<8x32xf32>
    %cst_17 = arith.constant 0.000000e+00 : f32
    %24 = vector.broadcast %cst_17 : f32 to vector<8x32xf32>
    %25 = arith.maximumf %23, %24 : vector<8x32xf32>
    %26 = arith.truncf %25 : vector<8x32xf32> to vector<8x32xbf16>
    %c0_18 = arith.constant 0 : index
    %c0_19 = arith.constant 0 : index
    %27 = vector.load %arg4[%c0_18, %c0_19] : memref<32x32xbf16, #tpu.memory_space<vmem>>, vector<32x32xbf16>
    %cst_20 = arith.constant dense<0.000000e+00> : vector<8x32xf32>
    %28 = tpu.matmul %26, %27, %cst_20 {dimension_numbers = #tpu.dot_dimension_numbers<[1], [0], [0], [1], [0, 0, 1, 1], [], []>} : vector<8x32xbf16>, vector<32x32xbf16>, vector<8x32xf32> -> vector<8x32xf32>
    %29 = vector.broadcast %3 : vector<1x32xf32> to vector<8x32xf32>
    %30 = arith.addf %28, %29 : vector<8x32xf32>
    %31 = arith.truncf %30 : vector<8x32xf32> to vector<8x32xbf16>
    %c0_21 = arith.constant 0 : index
    %c0_22 = arith.constant 0 : index
    %32 = vector.load %arg5[%c0_21, %c0_22] : memref<32x8xbf16, #tpu.memory_space<vmem>>, vector<32x8xbf16>
    %cst_23 = arith.constant dense<0.000000e+00> : vector<8x8xf32>
    %33 = tpu.matmul %31, %32, %cst_23 {dimension_numbers = #tpu.dot_dimension_numbers<[1], [0], [0], [1], [0, 0, 1, 1], [], []>} : vector<8x32xbf16>, vector<32x8xbf16>, vector<8x8xf32> -> vector<8x8xf32>
    %34 = vector.broadcast %4 : vector<1x8xf32> to vector<8x8xf32>
    %35 = arith.addf %33, %34 : vector<8x8xf32>
    %cst_24 = arith.constant 0.000000e+00 : f32
    %36 = vector.broadcast %cst_24 : f32 to vector<8x8xf32>
    %37 = arith.maximumf %35, %36 : vector<8x8xf32>
    %38 = arith.truncf %37 : vector<8x8xf32> to vector<8x8xbf16>
    %c0_25 = arith.constant 0 : index
    %c0_26 = arith.constant 0 : index
    %39 = vector.load %arg6[%c0_25, %c0_26] : memref<8x5xbf16, #tpu.memory_space<vmem>>, vector<8x5xbf16>
    %cst_27 = arith.constant dense<0.000000e+00> : vector<8x5xf32>
    %40 = tpu.matmul %38, %39, %cst_27 {dimension_numbers = #tpu.dot_dimension_numbers<[1], [0], [0], [1], [0, 0, 1, 1], [], []>} : vector<8x8xbf16>, vector<8x5xbf16>, vector<8x5xf32> -> vector<8x5xf32>
    %41 = vector.broadcast %5 : vector<1x5xf32> to vector<8x5xf32>
    %42 = arith.addf %40, %41 : vector<8x5xf32>
    %43 = arith.truncf %18 : vector<8x64xf32> to vector<8x64xbf16>
    %c0_28 = arith.constant 0 : index
    %c0_29 = arith.constant 0 : index
    %44 = vector.load %arg7[%c0_28, %c0_29] : memref<64x15xbf16, #tpu.memory_space<vmem>>, vector<64x15xbf16>
    %cst_30 = arith.constant dense<0.000000e+00> : vector<8x15xf32>
    %45 = tpu.matmul %43, %44, %cst_30 {dimension_numbers = #tpu.dot_dimension_numbers<[1], [0], [0], [1], [0, 0, 1, 1], [], []>} : vector<8x64xbf16>, vector<64x15xbf16>, vector<8x15xf32> -> vector<8x15xf32>
    %46 = vector.broadcast %6 : vector<1x15xf32> to vector<8x15xf32>
    %47 = arith.addf %45, %46 : vector<8x15xf32>
    %48 = arith.truncf %47 : vector<8x15xf32> to vector<8x15xbf16>
    %c0_31 = arith.constant 0 : index
    %c0_32 = arith.constant 0 : index
    %49 = vector.load %arg8[%c0_31, %c0_32] : memref<15x16xbf16, #tpu.memory_space<vmem>>, vector<15x16xbf16>
    %cst_33 = arith.constant dense<0.000000e+00> : vector<8x16xf32>
    %50 = tpu.matmul %48, %49, %cst_33 {dimension_numbers = #tpu.dot_dimension_numbers<[1], [0], [0], [1], [0, 0, 1, 1], [], []>} : vector<8x15xbf16>, vector<15x16xbf16>, vector<8x16xf32> -> vector<8x16xf32>
    %51 = vector.broadcast %7 : vector<1x16xf32> to vector<8x16xf32>
    %52 = arith.addf %50, %51 : vector<8x16xf32>
    %cst_34 = arith.constant 0.000000e+00 : f32
    %53 = vector.broadcast %cst_34 : f32 to vector<8x16xf32>
    %54 = arith.maximumf %52, %53 : vector<8x16xf32>
    %55 = arith.truncf %54 : vector<8x16xf32> to vector<8x16xbf16>
    %c0_35 = arith.constant 0 : index
    %c0_36 = arith.constant 0 : index
    %56 = vector.load %arg9[%c0_35, %c0_36] : memref<16x1xbf16, #tpu.memory_space<vmem>>, vector<16x1xbf16>
    %cst_37 = arith.constant dense<0.000000e+00> : vector<8x1xf32>
    %57 = tpu.matmul %55, %56, %cst_37 {dimension_numbers = #tpu.dot_dimension_numbers<[1], [0], [0], [1], [0, 0, 1, 1], [], []>} : vector<8x16xbf16>, vector<16x1xbf16>, vector<8x1xf32> -> vector<8x1xf32>
    %58 = vector.broadcast %8 : vector<1x1xf32> to vector<8x1xf32>
    %59 = arith.addf %57, %58 : vector<8x1xf32>
    %60 = tpu.concatenate %42, %59 in 1 : vector<8x5xf32>, vector<8x1xf32> -> vector<8x6xf32>
    %c0_38 = arith.constant 0 : index
    %c0_39 = arith.constant 0 : index
    %61 = vector.load %arg11[%c0_38, %c0_39] : memref<8x6xf32, #tpu.memory_space<vmem>>, vector<8x6xf32>
    tpu.vector_store %arg11[%c0_38, %c0_39], %60 {strides = array<i32>} : memref<8x6xf32, #tpu.memory_space<vmem>>, vector<8x6xf32>,
    return
  }
  func.func @transform_0(%arg0: i32) -> (i32, i32) {
    %c0_i32 = arith.constant 0 : i32
    %c0_i32_0 = arith.constant 0 : i32
    return %arg0, %c0_i32 : i32, i32
  }
  func.func @transform_1(%arg0: i32) -> (i32, i32) {
    %c0_i32 = arith.constant 0 : i32
    %c0_i32_0 = arith.constant 0 : i32
    %c0_i32_1 = arith.constant 0 : i32
    return %c0_i32, %c0_i32_0 : i32, i32
  }
  func.func @transform_2(%arg0: i32) -> (i32, i32) {
    %c0_i32 = arith.constant 0 : i32
    %c0_i32_0 = arith.constant 0 : i32
    %c0_i32_1 = arith.constant 0 : i32
    return %c0_i32, %c0_i32_0 : i32, i32
  }
  func.func @transform_3(%arg0: i32) -> (i32, i32) {
    %c0_i32 = arith.constant 0 : i32
    %c0_i32_0 = arith.constant 0 : i32
    %c0_i32_1 = arith.constant 0 : i32
    return %c0_i32, %c0_i32_0 : i32, i32
  }
  func.func @transform_4(%arg0: i32) -> (i32, i32) {
    %c0_i32 = arith.constant 0 : i32
    %c0_i32_0 = arith.constant 0 : i32
    %c0_i32_1 = arith.constant 0 : i32
    return %c0_i32, %c0_i32_0 : i32, i32
  }
  func.func @transform_5(%arg0: i32) -> (i32, i32) {
    %c0_i32 = arith.constant 0 : i32
    %c0_i32_0 = arith.constant 0 : i32
    %c0_i32_1 = arith.constant 0 : i32
    return %c0_i32, %c0_i32_0 : i32, i32
  }
  func.func @transform_6(%arg0: i32) -> (i32, i32) {
    %c0_i32 = arith.constant 0 : i32
    %c0_i32_0 = arith.constant 0 : i32
    %c0_i32_1 = arith.constant 0 : i32
    return %c0_i32, %c0_i32_0 : i32, i32
  }
  func.func @transform_7(%arg0: i32) -> (i32, i32) {
    %c0_i32 = arith.constant 0 : i32
    %c0_i32_0 = arith.constant 0 : i32
    %c0_i32_1 = arith.constant 0 : i32
    return %c0_i32, %c0_i32_0 : i32, i32
  }
  func.func @transform_8(%arg0: i32) -> (i32, i32) {
    %c0_i32 = arith.constant 0 : i32
    %c0_i32_0 = arith.constant 0 : i32
    %c0_i32_1 = arith.constant 0 : i32
    return %c0_i32, %c0_i32_0 : i32, i32
  }
  func.func @transform_9(%arg0: i32) -> (i32, i32) {
    %c0_i32 = arith.constant 0 : i32
    %c0_i32_0 = arith.constant 0 : i32
    %c0_i32_1 = arith.constant 0 : i32
    return %c0_i32, %c0_i32_0 : i32, i32
  }
  func.func @transform_10(%arg0: i32) -> (i32, i32) {
    %c0_i32 = arith.constant 0 : i32
    %c0_i32_0 = arith.constant 0 : i32
    return %arg0, %c0_i32 : i32, i32
  }
}

</mosaic_0001>

<llo_original>
// kernel: tpu_custom_call.1
$region0: #{tpu_custom_call.1}
  #allocation0 [shape = 'u32[]', space=smem, size = 0x4, offset = 0x4, fixed_abs, tag = 'smem constant byte address 0x4 - core index']
  #allocation1 [shape = 'u32[144,128]{1,0:T(1,128)}', space=vmem, size = 0x12000, scoped, tag = 'internal scratch']
  %s0 = inlined_call_operand.vmem [shape: bf16[8,180], index: 0, kind: input, shape index: {}]
  %s1 = inlined_call_operand.hbm [shape: bf16[180,96], index: 1, kind: input, shape index: {}]
  %s2 = inlined_call_operand.vmem [shape: bf16[32,32], index: 2, kind: input, shape index: {}]
  %s3 = inlined_call_operand.vmem [shape: bf16[32,32], index: 3, kind: input, shape index: {}]
  %s4 = inlined_call_operand.vmem [shape: bf16[32,8], index: 4, kind: input, shape index: {}]
  %s5 = inlined_call_operand.vmem [shape: bf16[8,5], index: 5, kind: input, shape index: {}]
  %s6 = inlined_call_operand.vmem [shape: bf16[64,15], index: 6, kind: input, shape index: {}]
  %s7 = inlined_call_operand.vmem [shape: bf16[15,16], index: 7, kind: input, shape index: {}]
  %s8 = inlined_call_operand.vmem [shape: bf16[16,1], index: 8, kind: input, shape index: {}]
  %s9 = inlined_call_operand.vmem [shape: f32[1,205], index: 9, kind: input, shape index: {}]
  %s10 = inlined_call_operand.hbm [shape: f32[8,6], index: 10, kind: output, shape index: {}]
  %s11 = sld [smem:[#allocation0]]
  $region54: #{tpu_custom_call.1} parent=0
    _
  %s13 = ssub.s32 1, %s11
  %s14 = scalar_select 0, %s13, %s11
  $region1: #{tpu_custom_call.1} parent=0
    #allocation2 [shape = 'u8[47104]{0}', space=vmem, size = 0xb800, scoped, tag = 'input window, operand 1, single buffered']
    #allocation3 [shape = 's32[1]{0}', space=sflag, size = 0x4, scoped, tag = 'scoped memory for tpu_custom_call.1']
    #allocation4 [shape = 's32[1]{0}', space=sflag, size = 0x4, scoped, tag = 'scoped memory for tpu_custom_call.1']
    #allocation5 [shape = 'u8[4096]{0}', space=vmem, size = 0x1000, scoped, tag = 'output window, operand 0, single buffered']
    %15 = vsyncpa [#allocation3], 0
    %16 = vsyncpa [#allocation4], 0
    // Predicated region
    $region2: #{tpu_custom_call.1} parent=1 // pred_check
      _
    $region3: #{tpu_custom_call.1} parent=1 // pred_check_branch
      %18 = sbr.rel (0) target = $region5
    $region4: #{tpu_custom_call.1} parent=1 // pred_region
      _
    $region5: #{tpu_custom_call.1} parent=1 // pred_fallthru
      _
    // Predicated region
    $region6: #{tpu_custom_call.1} parent=1 // pred_check
      _
    $region7: #{tpu_custom_call.1} parent=1 // pred_check_branch
      %20 = sbr.rel (0) target = $region9
    $region8: #{tpu_custom_call.1} parent=1 // pred_region
      %s22 = ssub.s32 1472, 1472
      %23 = vsyncadd [#allocation3], %s22
      %s24 = sshll.u32 [#allocation2], 4
      %s25 = int_to_ptr.vmem [resolvable:$true] %s24
      %30 = dma.hbm_to_vmem [thread:$0]  %s1, 1472, %s25, [#allocation3], 64, 64, 4
    $region9: #{tpu_custom_call.1} parent=1 // pred_fallthru
      _
    // Predicated region
    $region10: #{tpu_custom_call.1} parent=1 // pred_check
      _
    $region11: #{tpu_custom_call.1} parent=1 // pred_check_branch
      %32 = sbr.rel (0) target = $region13
    $region12: #{tpu_custom_call.1} parent=1 // pred_region
      _
    $region13: #{tpu_custom_call.1} parent=1 // pred_fallthru
      _
    // Predicated region
    $region14: #{tpu_custom_call.1} parent=1 // pred_check
      _
    $region15: #{tpu_custom_call.1} parent=1 // pred_check_branch
      %34 = sbr.rel (0) target = $region17
    $region16: #{tpu_custom_call.1} parent=1 // pred_region
      _
    $region17: #{tpu_custom_call.1} parent=1 // pred_fallthru
      _
    // Predicated region
    $region18: #{tpu_custom_call.1} parent=1 // pred_check
      _
    $region19: #{tpu_custom_call.1} parent=1 // pred_check_branch
      %36 = sbr.rel (0) target = $region21
    $region20: #{tpu_custom_call.1} parent=1 // pred_region
      _
    $region21: #{tpu_custom_call.1} parent=1 // pred_fallthru
      _
    // Predicated region
    $region22: #{tpu_custom_call.1} parent=1 // pred_check
      _
    $region23: #{tpu_custom_call.1} parent=1 // pred_check_branch
      %38 = sbr.rel (0) target = $region25
    $region24: #{tpu_custom_call.1} parent=1 // pred_region
      _
    $region25: #{tpu_custom_call.1} parent=1 // pred_fallthru
      _
    // Predicated region
    $region26: #{tpu_custom_call.1} parent=1 // pred_check
      _
    $region27: #{tpu_custom_call.1} parent=1 // pred_check_branch
      %40 = sbr.rel (0) target = $region29
    $region28: #{tpu_custom_call.1} parent=1 // pred_region
      _
    $region29: #{tpu_custom_call.1} parent=1 // pred_fallthru
      _
    // Predicated region
    $region30: #{tpu_custom_call.1} parent=1 // pred_check
      _
    $region31: #{tpu_custom_call.1} parent=1 // pred_check_branch
      %42 = sbr.rel (0) target = $region33
    $region32: #{tpu_custom_call.1} parent=1 // pred_region
      _
    $region33: #{tpu_custom_call.1} parent=1 // pred_fallthru
      _
    // Predicated region
    $region34: #{tpu_custom_call.1} parent=1 // pred_check
      _
    $region35: #{tpu_custom_call.1} parent=1 // pred_check_branch
      %44 = sbr.rel (0) target = $region37
    $region36: #{tpu_custom_call.1} parent=1 // pred_region
      _
    $region37: #{tpu_custom_call.1} parent=1 // pred_fallthru
      _
    // Predicated region
    $region38: #{tpu_custom_call.1} parent=1 // pred_check
      _
    $region39: #{tpu_custom_call.1} parent=1 // pred_check_branch
      %46 = sbr.rel (0) target = $region41
    $region40: #{tpu_custom_call.1} parent=1 // pred_region
      _
    $region41: #{tpu_custom_call.1} parent=1 // pred_fallthru
      _
    // Predicated region
    $region42: #{tpu_custom_call.1} parent=1 // pred_check
      _
    $region43: #{tpu_custom_call.1} parent=1 // pred_check_branch
      %48 = sbr.rel (0) target = $region45
    $region44: #{tpu_custom_call.1} parent=1 // pred_region
      %49 = dma.done [#allocation3], 1472
    $region45: #{tpu_custom_call.1} parent=1 // pred_fallthru
      _
    %v51 = vld [vmem:[%s0] sm:$0xff]
    %v52 = vld [vmem:[%s9] sm:$0x1]
    %v53 = vld [vmem:[%s9 + $0x1] sm:$0x1]
    %v54 = vld [vmem:[#allocation2] sm:$0xf]
    %v55 = vld [vmem:[#allocation2 + $0x4] sm:$0xf]
    %v56 = vld [vmem:[#allocation2 + $0x8] sm:$0xf]
    %v57 = vld [vmem:[#allocation2 + $0xc] sm:$0xf]
    %v58 = vld [vmem:[#allocation2 + $0x10] sm:$0xf]
    %v59 = vld [vmem:[#allocation2 + $0x14] sm:$0xf]
    %v60 = vld [vmem:[#allocation2 + $0x18] sm:$0xf]
    %v61 = vld [vmem:[#allocation2 + $0x1c] sm:$0xf]
    %v62 = vld [vmem:[#allocation2 + $0x20] sm:$0xf]
    %v63 = vld [vmem:[#allocation2 + $0x24] sm:$0xf]
    %v64 = vld [vmem:[#allocation2 + $0x28] sm:$0xf]
    %v65 = vld [vmem:[#allocation2 + $0x2c] sm:$0xf]
    %v66 = vld [vmem:[#allocation2 + $0x30] sm:$0xf]
    %v67 = vld [vmem:[#allocation2 + $0x34] sm:$0xf]
    %v68 = vld [vmem:[#allocation2 + $0x38] sm:$0xf]
    %v69 = vld [vmem:[#allocation2 + $0x3c] sm:$0xf]
    %v70 = vld [vmem:[#allocation2 + $0x40] sm:$0xf]
    %v71 = vld [vmem:[#allocation2 + $0x44] sm:$0xf]
    %v72 = vld [vmem:[#allocation2 + $0x48] sm:$0xf]
    %v73 = vld [vmem:[#allocation2 + $0x4c] sm:$0xf]
    %v74 = vld [vmem:[#allocation2 + $0x50] sm:$0xf]
    %v75 = vld [vmem:[#allocation2 + $0x54] sm:$0xf]
    %v76 = vld [vmem:[#allocation2 + $0x58] sm:$0x3]
    %v78 = vlaneseq
    %v79 = vshrl.u32 %v78, 7
    %v80 = vsub.s32 0, %v79
    %v81 = vrot.slane %v52, %v80
    %v84 = vunpack.c.l.b16 %v51
    %v85 = vunpack.c.h.b16 %v51
    %v86 = vpack.c.b16 %v84, %v84
    %v87 = vpack.c.b16 %v85, %v85
    %v112 = vunpack.c.l.b16 %v54
    %v113 = vunpack.c.l.b16 %v55
    %v114 = vunpack.c.l.b16 %v56
    %v115 = vunpack.c.l.b16 %v57
    %v116 = vunpack.c.l.b16 %v58
    %v117 = vunpack.c.l.b16 %v59
    %v118 = vunpack.c.l.b16 %v60
    %v119 = vunpack.c.l.b16 %v61
    %v120 = vunpack.c.l.b16 %v62
    %v121 = vunpack.c.l.b16 %v63
    %v122 = vunpack.c.l.b16 %v64
    %v123 = vunpack.c.l.b16 %v65
    %v124 = vunpack.c.l.b16 %v66
    %v125 = vunpack.c.l.b16 %v67
    %v126 = vunpack.c.l.b16 %v68
    %v127 = vunpack.c.l.b16 %v69
    %v128 = vunpack.c.l.b16 %v70
    %v129 = vunpack.c.l.b16 %v71
    %v130 = vunpack.c.l.b16 %v72
    %v131 = vunpack.c.l.b16 %v73
    %v132 = vunpack.c.l.b16 %v74
    %v133 = vunpack.c.l.b16 %v75
    %v134 = vunpack.c.l.b16 %v76
    %v135 = vpack.c.b16 %v113, %v112
    %v136 = vpack.c.b16 %v115, %v114
    %v137 = vpack.c.b16 %v117, %v116
    %v138 = vpack.c.b16 %v119, %v118
    %v139 = vpack.c.b16 %v121, %v120
    %v140 = vpack.c.b16 %v123, %v122
    %v141 = vpack.c.b16 %v125, %v124
    %v142 = vpack.c.b16 %v127, %v126
    %v143 = vpack.c.b16 %v129, %v128
    %v144 = vpack.c.b16 %v131, %v130
    %v145 = vpack.c.b16 %v133, %v132
    %v146 = vpack.c.b16 %v134, %v134
    %vm158 = vcmask 424960
    %v160 = vsel %vm158, %v87, 0
    %vm162 = vcmask 1041408
    %v164 = vsel %vm162, %v146, 0
    %166 = vmatprep.subr.bf16.mxu0 0
    %167 = vmatpush1.bf16.msra.mxu0 %v142
    %168 = vmatprep.subr.bf16.mxu0 0
    %169 = vmatpush1.bf16.msra.mxu0 %v141
    %170 = vmatprep.subr.bf16.mxu0 0
    %171 = vmatpush1.bf16.msra.mxu0 %v140
    %172 = vmatprep.subr.bf16.mxu0 0
    %173 = vmatpush1.bf16.msra.mxu0 %v139
    %174 = vmatprep.subr.bf16.mxu0 0
    %175 = vmatpush1.bf16.msra.mxu0 %v138
    %176 = vmatprep.subr.bf16.mxu0 0
    %177 = vmatpush1.bf16.msra.mxu0 %v137
    %178 = vmatprep.subr.bf16.mxu0 0
    %179 = vmatpush1.bf16.msra.mxu0 %v136
    %180 = vmatprep.subr.bf16.mxu0 0
    %181 = vmatpush1.bf16.msra.mxu0 %v135
    %182 = vmatprep.subr.bf16.mxu0 0
    %183 = vmatpush2.bf16.msra.mxu0 0
    %184 = vmatprep.subr.bf16.mxu0 0
    %185 = vmatpush2.bf16.msra.mxu0 0
    %186 = vmatprep.subr.bf16.mxu0 0
    %187 = vmatpush2.bf16.msra.mxu0 0
    %188 = vmatprep.subr.bf16.mxu0 0
    %189 = vmatpush2.bf16.msra.mxu0 0
    %190 = vmatprep.subr.bf16.mxu0 0
    %191 = vmatpush2.bf16.msra.mxu0 %v164
    %192 = vmatprep.subr.bf16.mxu0 0
    %193 = vmatpush2.bf16.msra.mxu0 %v145
    %194 = vmatprep.subr.bf16.mxu0 0
    %195 = vmatpush2.bf16.msra.mxu0 %v144
    %196 = vmatprep.subr.bf16.mxu0 0
    %197 = vmatpush2.bf16.msra.mxu0 %v143
    %198 = vmatprep.mubr.bf16.mxu0 %v160
    %199 = vmatmul.mubr.bf16.gmra.mxu0 %v86
    %v200 = vpop.f32.mrf.mxu0
    %v201 = vadd.f32 %v81, %v200
    %v202 = vpop.f32.mrf.mxu0
    %v203 = vpop.f32.mrf.mxu0
    %v204 = vpop.f32.mrf.mxu0
    %205 = vdwg.mxu0
    %v206 = vmax.f32 %v201, 0.0
    %v207 = vpack.c.bf16 %v206, %v206
    %v208 = vld [vmem:[%s2] sm:$0xf]
    %v209 = vld [vmem:[%s2 + $0x4] sm:$0xf]
    %v210 = vld [vmem:[%s2 + $0x8] sm:$0xf]
    %v211 = vld [vmem:[%s2 + $0xc] sm:$0xf]
    %v216 = vunpack.c.l.b16 %v208
    %v217 = vunpack.c.l.b16 %v209
    %v218 = vunpack.c.l.b16 %v210
    %v219 = vunpack.c.l.b16 %v211
    %v220 = vpack.c.b16 %v217, %v216
    %v221 = vpack.c.b16 %v219, %v218
    %224 = vrot.lane.b32.xlu0 %v81, 32
    %v225 = vpop.permute.xlu0 %224
    %vm227 = vcmask 261120
    %v229 = vsel %vm227, %v207, 0
    %231 = vmatprep.subr.bf16.mxu0 0
    %232 = vmatpush1.bf16.msra.mxu0 0
    %233 = vmatprep.subr.bf16.mxu0 0
    %234 = vmatpush1.bf16.msra.mxu0 0
    %235 = vmatprep.subr.bf16.mxu0 0
    %236 = vmatpush1.bf16.msra.mxu0 0
    %237 = vmatprep.subr.bf16.mxu0 0
    %238 = vmatpush1.bf16.msra.mxu0 0
    %239 = vmatprep.subr.bf16.mxu0 0
    %240 = vmatpush1.bf16.msra.mxu0 0
    %241 = vmatprep.subr.bf16.mxu0 0
    %242 = vmatpush1.bf16.msra.mxu0 0
    %243 = vmatprep.subr.bf16.mxu0 0
    %244 = vmatpush1.bf16.msra.mxu0 %v221
    %245 = vmatprep.subr.bf16.mxu0 0
    %246 = vmatpush1.bf16.msra.mxu0 %v220
    %247 = vmatprep.subr.bf16.mxu0 0
    %248 = vmatpush2.bf16.msra.mxu0 0
    %249 = vmatprep.subr.bf16.mxu0 0
    %250 = vmatpush2.bf16.msra.mxu0 0
    %251 = vmatprep.subr.bf16.mxu0 0
    %252 = vmatpush2.bf16.msra.mxu0 0
    %253 = vmatprep.subr.bf16.mxu0 0
    %254 = vmatpush2.bf16.msra.mxu0 0
    %255 = vmatprep.subr.bf16.mxu0 0
    %256 = vmatpush2.bf16.msra.mxu0 0
    %257 = vmatprep.subr.bf16.mxu0 0
    %258 = vmatpush2.bf16.msra.mxu0 0
    %259 = vmatprep.subr.bf16.mxu0 0
    %260 = vmatpush2.bf16.msra.mxu0 0
    %261 = vmatprep.subr.bf16.mxu0 0
    %262 = vmatpush2.bf16.msra.mxu0 0
    %263 = vmatprep.mubr.bf16.mxu0 0
    %264 = vmatmul.mubr.bf16.gmra.mxu0 %v229
    %v265 = vpop.f32.mrf.mxu0
    %v266 = vadd.f32 %v225, %v265
    %v267 = vpop.f32.mrf.mxu0
    %v268 = vpop.f32.mrf.mxu0
    %v269 = vpop.f32.mrf.mxu0
    %270 = vdwg.mxu0
    %v271 = vmax.f32 %v266, 0.0
    %v272 = vpack.c.bf16 %v271, %v271
    %v273 = vld [vmem:[%s3] sm:$0xf]
    %v274 = vld [vmem:[%s3 + $0x4] sm:$0xf]
    %v275 = vld [vmem:[%s3 + $0x8] sm:$0xf]
    %v276 = vld [vmem:[%s3 + $0xc] sm:$0xf]
    %v278 = vlaneseq
    %v279 = vshrl.u32 %v278, 7
    %v280 = vsub.s32 0, %v279
    %v281 = vrot.slane %v53, %v280
    %v287 = vunpack.c.l.b16 %v273
    %v288 = vunpack.c.l.b16 %v274
    %v289 = vunpack.c.l.b16 %v275
    %v290 = vunpack.c.l.b16 %v276
    %v291 = vpack.c.b16 %v288, %v287
    %v292 = vpack.c.b16 %v290, %v289
    %v296 = vsel %vm227, %v272, 0
    %298 = vmatprep.subr.bf16.mxu0 0
    %299 = vmatpush1.bf16.msra.mxu0 0
    %300 = vmatprep.subr.bf16.mxu0 0
    %301 = vmatpush1.bf16.msra.mxu0 0
    %302 = vmatprep.subr.bf16.mxu0 0
    %303 = vmatpush1.bf16.msra.mxu0 0
    %304 = vmatprep.subr.bf16.mxu0 0
    %305 = vmatpush1.bf16.msra.mxu0 0
    %306 = vmatprep.subr.bf16.mxu0 0
    %307 = vmatpush1.bf16.msra.mxu0 0
    %308 = vmatprep.subr.bf16.mxu0 0
    %309 = vmatpush1.bf16.msra.mxu0 0
    %310 = vmatprep.subr.bf16.mxu0 0
    %311 = vmatpush1.bf16.msra.mxu0 %v292
    %312 = vmatprep.subr.bf16.mxu0 0
    %313 = vmatpush1.bf16.msra.mxu0 %v291
    %314 = vmatprep.subr.bf16.mxu0 0
    %315 = vmatpush2.bf16.msra.mxu0 0
    %316 = vmatprep.subr.bf16.mxu0 0
    %317 = vmatpush2.bf16.msra.mxu0 0
    %318 = vmatprep.subr.bf16.mxu0 0
    %319 = vmatpush2.bf16.msra.mxu0 0
    %320 = vmatprep.subr.bf16.mxu0 0
    %321 = vmatpush2.bf16.msra.mxu0 0
    %322 = vmatprep.subr.bf16.mxu0 0
    %323 = vmatpush2.bf16.msra.mxu0 0
    %324 = vmatprep.subr.bf16.mxu0 0
    %325 = vmatpush2.bf16.msra.mxu0 0
    %326 = vmatprep.subr.bf16.mxu0 0
    %327 = vmatpush2.bf16.msra.mxu0 0
    %328 = vmatprep.subr.bf16.mxu0 0
    %329 = vmatpush2.bf16.msra.mxu0 0
    %330 = vmatprep.mubr.bf16.mxu0 0
    %331 = vmatmul.mubr.bf16.gmra.mxu0 %v296
    %v332 = vpop.f32.mrf.mxu0
    %v333 = vadd.f32 %v281, %v332
    %v334 = vpop.f32.mrf.mxu0
    %v335 = vpop.f32.mrf.mxu0
    %v336 = vpop.f32.mrf.mxu0
    %337 = vdwg.mxu0
    %v338 = vpack.c.bf16 %v333, %v333
    %v339 = vld [vmem:[%s4] sm:$0xf]
    %v340 = vld [vmem:[%s4 + $0x4] sm:$0xf]
    %v341 = vld [vmem:[%s4 + $0x8] sm:$0xf]
    %v342 = vld [vmem:[%s4 + $0xc] sm:$0xf]
    %v347 = vunpack.c.l.b16 %v339
    %v348 = vunpack.c.l.b16 %v340
    %v349 = vunpack.c.l.b16 %v341
    %v350 = vunpack.c.l.b16 %v342
    %v351 = vpack.c.b16 %v348, %v347
    %v352 = vpack.c.b16 %v350, %v349
    %355 = vrot.lane.b32.xlu0 %v281, 96
    %v356 = vpop.permute.xlu0 %355
    %v359 = vsel %vm227, %v338, 0
    %361 = vmatprep.subr.bf16.mxu0 0
    %362 = vmatpush1.bf16.msra.mxu0 0
    %363 = vmatprep.subr.bf16.mxu0 0
    %364 = vmatpush1.bf16.msra.mxu0 0
    %365 = vmatprep.subr.bf16.mxu0 0
    %366 = vmatpush1.bf16.msra.mxu0 0
    %367 = vmatprep.subr.bf16.mxu0 0
    %368 = vmatpush1.bf16.msra.mxu0 0
    %369 = vmatprep.subr.bf16.mxu0 0
    %370 = vmatpush1.bf16.msra.mxu0 0
    %371 = vmatprep.subr.bf16.mxu0 0
    %372 = vmatpush1.bf16.msra.mxu0 0
    %373 = vmatprep.subr.bf16.mxu0 0
    %374 = vmatpush1.bf16.msra.mxu0 %v352
    %375 = vmatprep.subr.bf16.mxu0 0
    %376 = vmatpush1.bf16.msra.mxu0 %v351
    %377 = vmatprep.subr.bf16.mxu0 0
    %378 = vmatpush2.bf16.msra.mxu0 0
    %379 = vmatprep.subr.bf16.mxu0 0
    %380 = vmatpush2.bf16.msra.mxu0 0
    %381 = vmatprep.subr.bf16.mxu0 0
    %382 = vmatpush2.bf16.msra.mxu0 0
    %383 = vmatprep.subr.bf16.mxu0 0
    %384 = vmatpush2.bf16.msra.mxu0 0
    %385 = vmatprep.subr.bf16.mxu0 0
    %386 = vmatpush2.bf16.msra.mxu0 0
    %387 = vmatprep.subr.bf16.mxu0 0
    %388 = vmatpush2.bf16.msra.mxu0 0
    %389 = vmatprep.subr.bf16.mxu0 0
    %390 = vmatpush2.bf16.msra.mxu0 0
    %391 = vmatprep.subr.bf16.mxu0 0
    %392 = vmatpush2.bf16.msra.mxu0 0
    %393 = vmatprep.mubr.bf16.mxu0 0
    %394 = vmatmul.mubr.bf16.gmra.mxu0 %v359
    %v395 = vpop.f32.mrf.mxu0
    %v396 = vadd.f32 %v356, %v395
    %v397 = vpop.f32.mrf.mxu0
    %v398 = vpop.f32.mrf.mxu0
    %v399 = vpop.f32.mrf.mxu0
    %400 = vdwg.mxu0
    %v401 = vmax.f32 %v396, 0.0
    %v402 = vpack.c.bf16 %v401, %v401
    %v403 = vld [vmem:[%s5] sm:$0xf]
    %404 = vrot.lane.b32.xlu0 %v281, 88
    %v405 = vpop.permute.xlu0 %404
    %vm407 = vcmask 64512
    %v409 = vsel %vm407, %v402, 0
    %vm411 = vcmask 1043456
    %v413 = vsel %vm411, %v403, 0
    %415 = vmatprep.subr.bf16.mxu0 0
    %416 = vmatpush1.bf16.msra.mxu0 0
    %417 = vmatprep.subr.bf16.mxu0 0
    %418 = vmatpush1.bf16.msra.mxu0 0
    %419 = vmatprep.subr.bf16.mxu0 0
    %420 = vmatpush1.bf16.msra.mxu0 0
    %421 = vmatprep.subr.bf16.mxu0 0
    %422 = vmatpush1.bf16.msra.mxu0 0
    %423 = vmatprep.subr.bf16.mxu0 0
    %424 = vmatpush1.bf16.msra.mxu0 0
    %425 = vmatprep.subr.bf16.mxu0 0
    %426 = vmatpush1.bf16.msra.mxu0 0
    %427 = vmatprep.subr.bf16.mxu0 0
    %428 = vmatpush1.bf16.msra.mxu0 0
    %429 = vmatprep.subr.bf16.mxu0 0
    %430 = vmatpush1.bf16.msra.mxu0 %v413
    %431 = vmatprep.subr.bf16.mxu0 0
    %432 = vmatpush2.bf16.msra.mxu0 0
    %433 = vmatprep.subr.bf16.mxu0 0
    %434 = vmatpush2.bf16.msra.mxu0 0
    %435 = vmatprep.subr.bf16.mxu0 0
    %436 = vmatpush2.bf16.msra.mxu0 0
    %437 = vmatprep.subr.bf16.mxu0 0
    %438 = vmatpush2.bf16.msra.mxu0 0
    %439 = vmatprep.subr.bf16.mxu0 0
    %440 = vmatpush2.bf16.msra.mxu0 0
    %441 = vmatprep.subr.bf16.mxu0 0
    %442 = vmatpush2.bf16.msra.mxu0 0
    %443 = vmatprep.subr.bf16.mxu0 0
    %444 = vmatpush2.bf16.msra.mxu0 0
    %445 = vmatprep.subr.bf16.mxu0 0
    %446 = vmatpush2.bf16.msra.mxu0 0
    %447 = vmatprep.mubr.bf16.mxu0 0
    %448 = vmatmul.mubr.bf16.gmra.mxu0 %v409
    %v449 = vpop.f32.mrf.mxu0
    %v450 = vadd.f32 %v405, %v449
    %v451 = vpop.f32.mrf.mxu0
    %v452 = vpop.f32.mrf.mxu0
    %v453 = vpop.f32.mrf.mxu0
    %454 = vdwg.mxu0
    %v455 = vld [vmem:[%s6] sm:$0xf]
    %v456 = vld [vmem:[%s6 + $0x4] sm:$0xf]
    %v457 = vld [vmem:[%s6 + $0x8] sm:$0xf]
    %v458 = vld [vmem:[%s6 + $0xc] sm:$0xf]
    %v459 = vld [vmem:[%s6 + $0x10] sm:$0xf]
    %v460 = vld [vmem:[%s6 + $0x14] sm:$0xf]
    %v461 = vld [vmem:[%s6 + $0x18] sm:$0xf]
    %v462 = vld [vmem:[%s6 + $0x1c] sm:$0xf]
    %464 = vrot.lane.b32.xlu0 %v207, 96
    %v465 = vpop.permute.xlu0 %464
    %v474 = vunpack.c.l.b16 %v455
    %v475 = vunpack.c.l.b16 %v456
    %v476 = vunpack.c.l.b16 %v457
    %v477 = vunpack.c.l.b16 %v458
    %v478 = vunpack.c.l.b16 %v459
    %v479 = vunpack.c.l.b16 %v460
    %v480 = vunpack.c.l.b16 %v461
    %v481 = vunpack.c.l.b16 %v462
    %v482 = vpack.c.b16 %v475, %v474
    %v483 = vpack.c.b16 %v477, %v476
    %v484 = vpack.c.b16 %v479, %v478
    %v485 = vpack.c.b16 %v481, %v480
    %490 = vrot.lane.b32.xlu0 %v281, 83
    %v491 = vpop.permute.xlu0 %490
    %vm493 = vcmask 523264
    %v495 = vsel %vm493, %v465, 0
    %497 = vmatprep.subr.bf16.mxu0 0
    %498 = vmatpush1.bf16.msra.mxu0 0
    %499 = vmatprep.subr.bf16.mxu0 0
    %500 = vmatpush1.bf16.msra.mxu0 0
    %501 = vmatprep.subr.bf16.mxu0 0
    %502 = vmatpush1.bf16.msra.mxu0 0
    %503 = vmatprep.subr.bf16.mxu0 0
    %504 = vmatpush1.bf16.msra.mxu0 0
    %505 = vmatprep.subr.bf16.mxu0 0
    %506 = vmatpush1.bf16.msra.mxu0 %v485
    %507 = vmatprep.subr.bf16.mxu0 0
    %508 = vmatpush1.bf16.msra.mxu0 %v484
    %509 = vmatprep.subr.bf16.mxu0 0
    %510 = vmatpush1.bf16.msra.mxu0 %v483
    %511 = vmatprep.subr.bf16.mxu0 0
    %512 = vmatpush1.bf16.msra.mxu0 %v482
    %513 = vmatprep.subr.bf16.mxu0 0
    %514 = vmatpush2.bf16.msra.mxu0 0
    %515 = vmatprep.subr.bf16.mxu0 0
    %516 = vmatpush2.bf16.msra.mxu0 0
    %517 = vmatprep.subr.bf16.mxu0 0
    %518 = vmatpush2.bf16.msra.mxu0 0
    %519 = vmatprep.subr.bf16.mxu0 0
    %520 = vmatpush2.bf16.msra.mxu0 0
    %521 = vmatprep.subr.bf16.mxu0 0
    %522 = vmatpush2.bf16.msra.mxu0 0
    %523 = vmatprep.subr.bf16.mxu0 0
    %524 = vmatpush2.bf16.msra.mxu0 0
    %525 = vmatprep.subr.bf16.mxu0 0
    %526 = vmatpush2.bf16.msra.mxu0 0
    %527 = vmatprep.subr.bf16.mxu0 0
    %528 = vmatpush2.bf16.msra.mxu0 0
    %529 = vmatprep.mubr.bf16.mxu0 0
    %530 = vmatmul.mubr.bf16.gmra.mxu0 %v495
    %v531 = vpop.f32.mrf.mxu0
    %v532 = vadd.f32 %v491, %v531
    %v533 = vpop.f32.mrf.mxu0
    %v534 = vpop.f32.mrf.mxu0
    %v535 = vpop.f32.mrf.mxu0
    %536 = vdwg.mxu0
    %v537 = vpack.c.bf16 %v532, %v532
    %v538 = vld [vmem:[%s7] sm:$0xf]
    %v539 = vld [vmem:[%s7 + $0x4] sm:$0xf]
    %v542 = vunpack.c.l.b16 %v538
    %v543 = vunpack.c.l.b16 %v539
    %v544 = vpack.c.b16 %v543, %v542
    %545 = vrot.lane.b32.xlu0 %v281, 68
    %v546 = vpop.permute.xlu0 %545
    %vm548 = vcmask 121856
    %v550 = vsel %vm548, %v537, 0
    %vm552 = vcmask 1046528
    %vm553 = vcmask 1047552
    %v554 = vsel %vm552, 4294967295, 65535
    %v555 = vsel %vm553, %v554, 0
    %v557 = vand.u32 %v544, %v555
    %559 = vmatprep.subr.bf16.mxu0 0
    %560 = vmatpush1.bf16.msra.mxu0 0
    %561 = vmatprep.subr.bf16.mxu0 0
    %562 = vmatpush1.bf16.msra.mxu0 0
    %563 = vmatprep.subr.bf16.mxu0 0
    %564 = vmatpush1.bf16.msra.mxu0 0
    %565 = vmatprep.subr.bf16.mxu0 0
    %566 = vmatpush1.bf16.msra.mxu0 0
    %567 = vmatprep.subr.bf16.mxu0 0
    %568 = vmatpush1.bf16.msra.mxu0 0
    %569 = vmatprep.subr.bf16.mxu0 0
    %570 = vmatpush1.bf16.msra.mxu0 0
    %571 = vmatprep.subr.bf16.mxu0 0
    %572 = vmatpush1.bf16.msra.mxu0 0
    %573 = vmatprep.subr.bf16.mxu0 0
    %574 = vmatpush1.bf16.msra.mxu0 %v557
    %575 = vmatprep.subr.bf16.mxu0 0
    %576 = vmatpush2.bf16.msra.mxu0 0
    %577 = vmatprep.subr.bf16.mxu0 0
    %578 = vmatpush2.bf16.msra.mxu0 0
    %579 = vmatprep.subr.bf16.mxu0 0
    %580 = vmatpush2.bf16.msra.mxu0 0
    %581 = vmatprep.subr.bf16.mxu0 0
    %582 = vmatpush2.bf16.msra.mxu0 0
    %583 = vmatprep.subr.bf16.mxu0 0
    %584 = vmatpush2.bf16.msra.mxu0 0
    %585 = vmatprep.subr.bf16.mxu0 0
    %586 = vmatpush2.bf16.msra.mxu0 0
    %587 = vmatprep.subr.bf16.mxu0 0
    %588 = vmatpush2.bf16.msra.mxu0 0
    %589 = vmatprep.subr.bf16.mxu0 0
    %590 = vmatpush2.bf16.msra.mxu0 0
    %591 = vmatprep.mubr.bf16.mxu0 0
    %592 = vmatmul.mubr.bf16.gmra.mxu0 %v550
    %v593 = vpop.f32.mrf.mxu0
    %v594 = vadd.f32 %v546, %v593
    %v595 = vpop.f32.mrf.mxu0
    %v596 = vpop.f32.mrf.mxu0
    %v597 = vpop.f32.mrf.mxu0
    %598 = vdwg.mxu0
    %v599 = vmax.f32 %v594, 0.0
    %v600 = vpack.c.bf16 %v599, %v599
    %v601 = vld [vmem:[%s8] sm:$0xf]
    %v602 = vld [vmem:[%s8 + $0x4] sm:$0xf]
    %v605 = vunpack.c.l.b16 %v601
    %v606 = vunpack.c.l.b16 %v602
    %v607 = vpack.c.b16 %v606, %v605
    %609 = vrot.lane.b32.xlu0 %v281, 52
    %v610 = vpop.permute.xlu0 %609
    %vm612 = vcmask 130048
    %v614 = vsel %vm612, %v600, 0
    %616 = vmatprep.subr.bf16.mxu0 0
    %617 = vmatpush1.bf16.msra.mxu0 0
    %618 = vmatprep.subr.bf16.mxu0 0
    %619 = vmatpush1.bf16.msra.mxu0 0
    %620 = vmatprep.subr.bf16.mxu0 0
    %621 = vmatpush1.bf16.msra.mxu0 0
    %622 = vmatprep.subr.bf16.mxu0 0
    %623 = vmatpush1.bf16.msra.mxu0 0
    %624 = vmatprep.subr.bf16.mxu0 0
    %625 = vmatpush1.bf16.msra.mxu0 0
    %626 = vmatprep.subr.bf16.mxu0 0
    %627 = vmatpush1.bf16.msra.mxu0 0
    %628 = vmatprep.subr.bf16.mxu0 0
    %629 = vmatpush1.bf16.msra.mxu0 0
    %630 = vmatprep.subr.bf16.mxu0 0
    %631 = vmatpush1.bf16.msra.mxu0 %v607
    %632 = vmatprep.subr.bf16.mxu0 0
    %633 = vmatpush2.bf16.msra.mxu0 0
    %634 = vmatprep.subr.bf16.mxu0 0
    %635 = vmatpush2.bf16.msra.mxu0 0
    %636 = vmatprep.subr.bf16.mxu0 0
    %637 = vmatpush2.bf16.msra.mxu0 0
    %638 = vmatprep.subr.bf16.mxu0 0
    %639 = vmatpush2.bf16.msra.mxu0 0
    %640 = vmatprep.subr.bf16.mxu0 0
    %641 = vmatpush2.bf16.msra.mxu0 0
    %642 = vmatprep.subr.bf16.mxu0 0
    %643 = vmatpush2.bf16.msra.mxu0 0
    %644 = vmatprep.subr.bf16.mxu0 0
    %645 = vmatpush2.bf16.msra.mxu0 0
    %646 = vmatprep.subr.bf16.mxu0 0
    %647 = vmatpush2.bf16.msra.mxu0 0
    %648 = vmatprep.mubr.bf16.mxu0 0
    %649 = vmatmul.mubr.bf16.gmra.mxu0 %v614
    %v650 = vpop.f32.mrf.mxu0
    %v651 = vadd.f32 %v610, %v650
    %v652 = vpop.f32.mrf.mxu0
    %v653 = vpop.f32.mrf.mxu0
    %v654 = vpop.f32.mrf.mxu0
    %655 = vdwg.mxu0
    %657 = vrot.lane.b32.xlu0 %v651, 5
    %v658 = vpop.permute.xlu0 %657
    %vm660 = vcmask 39936
    %v661 = vsel %vm660, %v450, %v658
    %vm662 = vcmask 48128
    %663 = vst.msk [vmem:[#allocation5] sm:$0xff] %vm662, %v661
    // Predicated region
    $region46: #{tpu_custom_call.1} parent=1 // pred_check
      _
    $region47: #{tpu_custom_call.1} parent=1 // pred_check_branch
      %665 = sbr.rel (0) target = $region49
    $region48: #{tpu_custom_call.1} parent=1 // pred_region
      %s667 = ssub.s32 128, 128
      %668 = vsyncadd [#allocation4], %s667
      %s670 = sshll.u32 [#allocation5], 4
      %s671 = int_to_ptr.vmem [resolvable:$true] %s670
      %673 = dma.vmem_to_hbm [thread:$0]  %s671, 128, %s10, [#allocation4]
    $region49: #{tpu_custom_call.1} parent=1 // pred_fallthru
      _
    // Predicated region
    $region50: #{tpu_custom_call.1} parent=1 // pred_check
      _
    $region51: #{tpu_custom_call.1} parent=1 // pred_check_branch
      %675 = sbr.rel (0) target = $region53
    $region52: #{tpu_custom_call.1} parent=1 // pred_region
      %676 = dma.done [#allocation4], 128
    $region53: #{tpu_custom_call.1} parent=1 // pred_fallthru
      _
    %677 = vsyncpa [#allocation3], 1
    %678 = vsyncpa [#allocation4], 1

</llo_original>
